<compile_context>
chip_gen: v5e
topology: v5e:2x2
jax: 0.10.0
libtpu: 0.0.40
codegen_flags: <defaults>
</compile_context>

<pallas_src>
import functools

import jax
import jax.numpy as jnp
from jax import lax
from jax.experimental import pallas as pl
from jax.experimental.pallas import tpu as pltpu


def _cdiv(a, b):
    return -(-a // b)


def _round_up(a, b):
    return _cdiv(a, b) * b


def _zero_index_map(nd):
    return lambda g: (0,) * nd


def _tpu_generation_info():
    """Return (tensorcores_per_chip, physical_vmem_bytes) for the default device."""
    kind = ""
    try:
        kind = jax.devices()[0].device_kind.lower()
    except Exception:
        pass
    if "v7" in kind or "tpu7" in kind:
        return 2, 64 * 1024 * 1024            # v7x: 2 TCs / chip, 64 MiB VMEM per TC
    if "v4" in kind or "v5p" in kind:
        return 2, 128 * 1024 * 1024           # megacore parts
    return 1, 128 * 1024 * 1024               # v5e / v6e / default: 1 TC, 128 MiB


def _block_diag_v(w, V):
    """(..., ci, co) -> (..., V*ci, V*co), block-diagonal over the V vertices."""
    ci, co = w.shape[-2], w.shape[-1]
    eye = jnp.eye(V, dtype=w.dtype)
    bd = jnp.einsum("vu,...ij->...viuj", eye, w)
    return bd.reshape(w.shape[:-2] + (V * ci, V * co))


def _output_block_kernel(*refs, Kt, gated, act_func, eps, compute_dtype):
    if gated:
        (x_ref, wv_ref, bv_ref, wg_ref, bg_ref, gamma_ref, beta_ref,
         wfc1_ref, bfc1_ref, wfc2_ref, bfc2_ref, out_ref) = refs
    else:
        (x_ref, wv_ref, bv_ref, gamma_ref, beta_ref,
         wfc1_ref, bfc1_ref, wfc2_ref, bfc2_ref, out_ref) = refs
        wg_ref = bg_ref = None

    x = x_ref[...]                               # (bblk, T, V*c_in), compute dtype
    bblk, T, vcin = x.shape
    T_out = T - Kt + 1
    rows = bblk * T_out
    vc0 = wv_ref.shape[2]

    # Causal temporal conv: Kt-tap accumulation.  Each tap is a leading-dim
    # slice + reshape (layout preserving) feeding one MXU matmul against the
    # block-diagonal-over-V tap weight.  The Align residual is pre-folded into
    # tap Kt-1 of the value-path weights by the wrapper.
    def tap(k):
        return x[:, k:k + T_out].reshape(rows, vcin)

    x0 = tap(0)
    acc_v = jnp.dot(x0, wv_ref[0], preferred_element_type=jnp.float32)
    acc_g = (jnp.dot(x0, wg_ref[0], preferred_element_type=jnp.float32)
             if gated else None)
    for k in range(1, Kt):
        xk = tap(k)
        acc_v = acc_v + jnp.dot(xk, wv_ref[k], preferred_element_type=jnp.float32)
        if gated:
            acc_g = acc_g + jnp.dot(xk, wg_ref[k], preferred_element_type=jnp.float32)
    acc_v = acc_v + bv_ref[...]
    if gated:
        acc_g = acc_g + bg_ref[...]

    # Activation (TemporalConvLayer); the residual is already inside acc_v.
    if act_func == "glu":
        h = acc_v * jax.nn.sigmoid(acc_g)
    elif act_func == "gtu":
        h = jnp.tanh(acc_v) * jax.nn.sigmoid(acc_g)
    elif act_func == "relu":
        h = jnp.maximum(acc_v, 0.0)
    elif act_func == "leaky_relu":
        h = jnp.where(acc_v >= 0, acc_v, 0.01 * acc_v)
    elif act_func == "silu":
        h = acc_v * jax.nn.sigmoid(acc_v)
    else:
        raise NotImplementedError(act_func)

    # LayerNorm over [V, c0] == the V*c0 lane axis.  One-pass stats
    # (sum + sum-of-squares) -> a single cross-lane reduction per row.
    inv_n = 1.0 / float(vc0)
    s = jnp.sum(h, axis=-1, keepdims=True)
    s2 = jnp.sum(h * h, axis=-1, keepdims=True)
    mu = s * inv_n
    var = jnp.maximum(s2 * inv_n - mu * mu, 0.0)
    hn = (h - mu) * lax.rsqrt(var + eps)
    hn = hn * gamma_ref[...] + beta_ref[...]

    # fc1 -> relu -> fc2, block-diagonal over V: stays lane-dense so the result
    # is stored directly as the (rows, 128k) output slab (unmasked stores).
    h1 = jnp.dot(hn.astype(compute_dtype), wfc1_ref[...],
                 preferred_element_type=jnp.float32) + bfc1_ref[...]
    h1 = jnp.maximum(h1, 0.0)
    h2 = jnp.dot(h1.astype(compute_dtype), wfc2_ref[...],
                 preferred_element_type=jnp.float32) + bfc2_ref[...]
    out_ref[...] = h2


def output_block_forward(x_nchw, params, *, Ko, act_func, eps=1e-5,
                         compute_dtype=jnp.bfloat16):
    """Fused OutputBlock forward.

    x_nchw: (B, c_in, T, V) float32 (PyTorch NCHW).  Returns (B, c_end, T-Ko+1, V).
    """
    B, c_in, T, V = x_nchw.shape
    c0, c1 = params["wfc1"].shape
    c_end = params["wfc2"].shape[1]
    c_conv = params["wconv"].shape[2]
    gated = act_func in ("glu", "gtu")
    assert c_conv == (2 * c0 if gated else c0)
    T_out = T - Ko + 1
    assert T_out >= 1, "Ko must be <= T"

    vcin, vc0, vc1 = V * c_in, V * c0, V * c1
    n_out = V * c_end
    n_out_pad = _round_up(n_out, 128)            # lane width padded for unmasked vst
    f32 = jnp.float32

    # ---- Split conv weights into value/gate paths; fold the Align residual
    # (identity / zero-pad / 1x1 conv) into the value path at tap Ko-1.
    wconv = params["wconv"].astype(f32)          # (Ko, c_in, c_conv)
    bconv = params["bconv"].astype(f32).reshape(c_conv)
    w_val, b_val = wconv[:, :, :c0], bconv[:c0]
    if c_in > c0:
        res_w = params["walign"].astype(f32)     # 1x1 Align conv
        b_val = b_val + params["balign"].astype(f32).reshape(c0)
    else:
        res_w = jnp.eye(c_in, c0, dtype=f32)     # identity / zero-pad
    w_val = w_val.at[Ko - 1].add(res_w)

    # ---- Block-diagonal-over-V operands keep the whole kernel in one
    # lane-dense (rows, V*c) layout -> no lane<->sublane relayouts in-kernel.
    # TODO(synk): for very large n_vertex the V-fold FLOP/weight blow-up of the
    # block-diagonal form would warrant a row-major (rows=B*T'*V, lanes=c) variant.
    wv_bd = _block_diag_v(w_val, V).astype(compute_dtype)       # (Ko, V*c_in, V*c0)
    bv = jnp.tile(b_val, V).reshape(1, vc0)
    weight_args = [wv_bd, bv]
    if gated:
        wg_bd = _block_diag_v(wconv[:, :, c0:], V).astype(compute_dtype)
        bg = jnp.tile(bconv[c0:], V).reshape(1, vc0)
        weight_args += [wg_bd, bg]

    gamma = params["gamma"].astype(f32).reshape(1, vc0)
    beta = params["beta"].astype(f32).reshape(1, vc0)
    wfc1_bd = _block_diag_v(params["wfc1"].astype(f32), V).astype(compute_dtype)
    bfc1 = jnp.tile(params["bfc1"].astype(f32).reshape(c1), V).reshape(1, vc1)
    wfc2_bd = _block_diag_v(params["wfc2"].astype(f32), V)       # (V*c1, V*c_end)
    bfc2 = jnp.tile(params["bfc2"].astype(f32).reshape(c_end), V).reshape(1, n_out)
    if n_out_pad != n_out:                       # zero-pad output lanes to 128 multiple
        wfc2_bd = jnp.pad(wfc2_bd, ((0, 0), (0, n_out_pad - n_out)))
        bfc2 = jnp.pad(bfc2, ((0, 0), (0, n_out_pad - n_out)))
    wfc2_bd = wfc2_bd.astype(compute_dtype)
    weight_args += [gamma, beta, wfc1_bd, bfc1, wfc2_bd, bfc2]
    param_bytes = sum(int(a.size) * int(a.dtype.itemsize) for a in weight_args)

    # ---- Generation-aware batch blocking: one big block (G=1) on single-TC
    # v5e/v6e, num_tc-way split on 2-TC parts so both TensorCores get work.
    num_tc, vmem_phys = _tpu_generation_info()
    vmem_cap = (48 << 20) if vmem_phys <= (64 << 20) else (100 << 20)
    x_bytes = jnp.dtype(compute_dtype).itemsize
    nacc = (2 if gated else 1) * vc0
    per_b_bytes = (2 * T * vcin * x_bytes                     # in block (double-buffered)
                   + 2 * T_out * n_out_pad * 4                # out block (double-buffered)
                   + 2 * T_out * (vcin + nacc + vc0 + vc1 + n_out_pad) * 4)  # live f32
    budget = max(vmem_cap // 2 - 2 * param_bytes, per_b_bytes)
    bblk_fit = max(1, budget // per_b_bytes)

    bblk = _cdiv(B, num_tc) if (num_tc >= 2 and B >= 2) else B
    bblk = max(1, min(bblk, bblk_fit, B))
    G = _cdiv(B, bblk)
    # (8,128) tiling rule: with G > 1 the out block's sublane dim must be 8-aligned.
    while G > 1 and (bblk * T_out) % 8 != 0:
        bblk += 1
        G = _cdiv(B, bblk)
    if G == 1:
        bblk = B
    Bp = G * bblk
    rows_blk = bblk * T_out

    # ---- Channels-and-vertices-last, lane-merged input (reshape is free: same
    # memory layout as NHWC); bf16 input halves the per-step input DMA.
    x = jnp.transpose(x_nchw, (0, 2, 3, 1)).reshape(B, T, vcin).astype(compute_dtype)
    if Bp != B:
        x = jnp.pad(x, ((0, Bp - B), (0, 0), (0, 0)))   # padded rows sliced off below

    kernel = functools.partial(_output_block_kernel, Kt=Ko, gated=gated,
                               act_func=act_func, eps=eps,
                               compute_dtype=compute_dtype)

    in_specs = [pl.BlockSpec((bblk, T, vcin), lambda g: (g, 0, 0))]
    for a in weight_args:
        in_specs.append(pl.BlockSpec(a.shape, _zero_index_map(a.ndim)))
    out_spec = pl.BlockSpec((rows_blk, n_out_pad), lambda g: (g, 0))

    # Advisory cost estimate for XLA scheduling around the custom call.
    mm_flops = 2 * Bp * T_out * (Ko * vcin * vc0 * (2 if gated else 1)
                                 + vc0 * vc1 + vc1 * n_out_pad)
    trans = Bp * T_out * vc0 if (gated or act_func == "silu") else 0
    bytes_accessed = int(x.size) * x_bytes + Bp * T_out * n_out_pad * 4 + param_bytes
    cost = pl.CostEstimate(flops=int(mm_flops), transcendentals=int(trans),
                           bytes_accessed=int(bytes_accessed))

    # Per-generation VMEM budget (double-buffered blocks + params + live f32
    # intermediates + headroom), capped at 48 MiB on v7x / ~100 MiB on v5e/v6e.
    vmem_limit = int(min(vmem_cap,
                         max(32 << 20,
                             2 * param_bytes + bblk * per_b_bytes + (16 << 20))))

    out2d = pl.pallas_call(
        kernel,
        out_shape=jax.ShapeDtypeStruct((G * rows_blk, n_out_pad), jnp.float32),
        grid=(G,),
        in_specs=in_specs,
        out_specs=out_spec,
        compiler_params=pltpu.CompilerParams(
            dimension_semantics=("parallel",),
            vmem_limit_bytes=vmem_limit),
        cost_estimate=cost,
    )(x, *weight_args)

    out = out2d[:, :n_out].reshape(Bp, T_out, V, c_end)[:B]
    return jnp.transpose(out, (0, 3, 1, 2))      # back to NCHW (B, c_end, T', V)


def output_block_ref(x_nchw, params, *, Ko, act_func, eps=1e-5):
    """Pure-JAX reference mirroring the PyTorch forward (unfused, f32)."""
    B, c_in, T, V = x_nchw.shape
    x = jnp.transpose(x_nchw, (0, 2, 3, 1)).astype(jnp.float32)   # (B, T, V, c_in)
    c0 = params["wfc1"].shape[0]
    T_out = T - Ko + 1

    xs = jnp.stack([x[:, k:k + T_out] for k in range(Ko)], axis=0)  # (Ko,B,T',V,c)
    y = jnp.einsum("kbtvc,kcd->btvd", xs, params["wconv"]) + params["bconv"]

    x_tail = x[:, Ko - 1:]
    if c_in > c0:
        x_in = jnp.einsum("btvc,cd->btvd", x_tail, params["walign"]) + params["balign"]
    elif c_in < c0:
        x_in = jnp.concatenate(
            [x_tail, jnp.zeros(x_tail.shape[:-1] + (c0 - c_in,), jnp.float32)], axis=-1)
    else:
        x_in = x_tail

    if act_func == "glu":
        h = (y[..., :c0] + x_in) * jax.nn.sigmoid(y[..., c0:])
    elif act_func == "gtu":
        h = jnp.tanh(y[..., :c0] + x_in) * jax.nn.sigmoid(y[..., c0:])
    elif act_func == "relu":
        h = jnp.maximum(y + x_in, 0.0)
    elif act_func == "leaky_relu":
        z = y + x_in
        h = jnp.where(z >= 0, z, 0.01 * z)
    elif act_func == "silu":
        z = y + x_in
        h = z * jax.nn.sigmoid(z)
    else:
        raise NotImplementedError(act_func)

    mu = jnp.mean(h, axis=(-2, -1), keepdims=True)
    var = jnp.mean((h - mu) ** 2, axis=(-2, -1), keepdims=True)
    hn = (h - mu) / jnp.sqrt(var + eps) * params["gamma"] + params["beta"]

    h1 = jnp.maximum(hn @ params["wfc1"] + params["bfc1"], 0.0)
    h2 = h1 @ params["wfc2"] + params["bfc2"]
    return jnp.transpose(h2, (0, 3, 1, 2))


def _make_params(key, Ko, c_in, c0, c1, c_end, V, act_func):
    c_conv = 2 * c0 if act_func in ("glu", "gtu") else c0
    ks = jax.random.split(key, 10)
    return {
        "wconv": jax.random.normal(ks[0], (Ko, c_in, c_conv), jnp.float32) * 0.1,
        "bconv": jax.random.normal(ks[1], (1, c_conv), jnp.float32) * 0.1,
        "walign": jax.random.normal(ks[2], (c_in, c0), jnp.float32) * 0.1,
        "balign": jax.random.normal(ks[3], (1, c0), jnp.float32) * 0.1,
        "gamma": 1.0 + jax.random.normal(ks[4], (V, c0), jnp.float32) * 0.1,
        "beta": jax.random.normal(ks[5], (V, c0), jnp.float32) * 0.1,
        "wfc1": jax.random.normal(ks[6], (c0, c1), jnp.float32) * 0.1,
        "bfc1": jax.random.normal(ks[7], (1, c1), jnp.float32) * 0.1,
        "wfc2": jax.random.normal(ks[8], (c1, c_end), jnp.float32) * 0.1,
        "bfc2": jax.random.normal(ks[9], (1, c_end), jnp.float32) * 0.1,
    }


if __name__ == "__main__":
    key = jax.random.PRNGKey(0)

    # Config 1: Ko=3, c_in=16 < channels[0]=32 (zero-pad Align residual), GLU, B=2.
    k1, k2, key = jax.random.split(key, 3)
    B, C_IN, T, V = 2, 16, 10, 8
    KO, C0, C1, C_END = 3, 32, 16, 8
    params = _make_params(k1, KO, C_IN, C0, C1, C_END, V, "glu")
    x = jax.random.normal(k2, (B, C_IN, T, V), jnp.float32)        # PyTorch NCHW input
    ref = output_block_ref(x, params, Ko=KO, act_func="glu")

    out_f32 = jax.block_until_ready(
        output_block_forward(x, params, Ko=KO, act_func="glu",
                             compute_dtype=jnp.float32))
    assert out_f32.shape == (B, C_END, T - KO + 1, V), out_f32.shape
    assert jnp.allclose(out_f32, ref, atol=5e-3, rtol=5e-3), \
        float(jnp.max(jnp.abs(out_f32 - ref)))

    out_bf16 = jax.block_until_ready(
        output_block_forward(x, params, Ko=KO, act_func="glu"))    # default bf16 operands
    assert out_bf16.shape == (B, C_END, T - KO + 1, V), out_bf16.shape
    assert jnp.allclose(out_bf16, ref, atol=8e-2, rtol=8e-2), \
        float(jnp.max(jnp.abs(out_bf16 - ref)))

    # Config 2: c_in=48 > channels[0]=32 (1x1 Align conv folded into conv weights),
    # relu activation, B=5 (odd batch exercises padded batch blocks on 2-TC parts).
    k3, k4 = jax.random.split(key)
    B2, C_IN2 = 5, 48
    params2 = _make_params(k3, KO, C_IN2, C0, C1, C_END, V, "relu")
    x2 = jax.random.normal(k4, (B2, C_IN2, T, V), jnp.float32)
    ref2 = output_block_ref(x2, params2, Ko=KO, act_func="relu")

    out2_f32 = jax.block_until_ready(
        output_block_forward(x2, params2, Ko=KO, act_func="relu",
                             compute_dtype=jnp.float32))
    assert out2_f32.shape == (B2, C_END, T - KO + 1, V), out2_f32.shape
    assert jnp.allclose(out2_f32, ref2, atol=5e-3, rtol=5e-3), \
        float(jnp.max(jnp.abs(out2_f32 - ref2)))

    out2_bf16 = jax.block_until_ready(
        output_block_forward(x2, params2, Ko=KO, act_func="relu"))
    assert jnp.allclose(out2_bf16, ref2, atol=8e-2, rtol=8e-2), \
        float(jnp.max(jnp.abs(out2_bf16 - ref2)))

    # TODO(synk): nn.Dropout is defined in __init__ but never used in forward; omitted.
    print("KERNEL_OK")
</pallas_src>

<mosaic_0001>
module attributes {stable_mosaic.version = 11 : i64} {
  func.func @_output_block_kernel(%arg0: i32, %arg1: memref<2x10x128xf32, #tpu.memory_space<vmem>>, %arg2: memref<3x128x256xf32, #tpu.memory_space<vmem>>, %arg3: memref<1x256xf32, #tpu.memory_space<vmem>>, %arg4: memref<3x128x256xf32, #tpu.memory_space<vmem>>, %arg5: memref<1x256xf32, #tpu.memory_space<vmem>>, %arg6: memref<1x256xf32, #tpu.memory_space<vmem>>, %arg7: memref<1x256xf32, #tpu.memory_space<vmem>>, %arg8: memref<256x128xf32, #tpu.memory_space<vmem>>, %arg9: memref<1x128xf32, #tpu.memory_space<vmem>>, %arg10: memref<128x128xf32, #tpu.memory_space<vmem>>, %arg11: memref<1x128xf32, #tpu.memory_space<vmem>>, %arg12: memref<16x128xf32, #tpu.memory_space<vmem>>) attributes {dimension_semantics = [#tpu.dimension_semantics<parallel>], iteration_bounds = array<i64: 1>, scalar_prefetch = 0 : i64, scratch_operands = 0 : i64, tpu.core_type = #tpu.core_type<tc>, window_params = [{transform_indices = @transform_0, window_bounds = array<i64: 2, 10, 128>}, {pipeline_mode = #tpu.pipeline_mode<synchronous>, transform_indices = @transform_1, window_bounds = array<i64: 3, 128, 256>}, {pipeline_mode = #tpu.pipeline_mode<synchronous>, transform_indices = @transform_2, window_bounds = array<i64: 1, 256>}, {pipeline_mode = #tpu.pipeline_mode<synchronous>, transform_indices = @transform_3, window_bounds = array<i64: 3, 128, 256>}, {pipeline_mode = #tpu.pipeline_mode<synchronous>, transform_indices = @transform_4, window_bounds = array<i64: 1, 256>}, {pipeline_mode = #tpu.pipeline_mode<synchronous>, transform_indices = @transform_5, window_bounds = array<i64: 1, 256>}, {pipeline_mode = #tpu.pipeline_mode<synchronous>, transform_indices = @transform_6, window_bounds = array<i64: 1, 256>}, {pipeline_mode = #tpu.pipeline_mode<synchronous>, transform_indices = @transform_7, window_bounds = array<i64: 256, 128>}, {pipeline_mode = #tpu.pipeline_mode<synchronous>, transform_indices = @transform_8, window_bounds = array<i64: 1, 128>}, {pipeline_mode = #tpu.pipeline_mode<synchronous>, transform_indices = @transform_9, window_bounds = array<i64: 128, 128>}, {pipeline_mode = #tpu.pipeline_mode<synchronous>, transform_indices = @transform_10, window_bounds = array<i64: 1, 128>}, {transform_indices = @transform_11, window_bounds = array<i64: 16, 128>}]} {
    %c0 = arith.constant 0 : index
    %c0_0 = arith.constant 0 : index
    %c0_1 = arith.constant 0 : index
    %0 = vector.load %arg1[%c0, %c0_0, %c0_1] : memref<2x10x128xf32, #tpu.memory_space<vmem>>, vector<2x10x128xf32>
    %1 = vector.extract_strided_slice %0 {offsets = [0, 0, 0], sizes = [2, 8, 128], strides = [1, 1, 1]} : vector<2x10x128xf32> to vector<2x8x128xf32>
    %2 = vector.shape_cast %1 : vector<2x8x128xf32> to vector<16x128xf32>
    %c0_2 = arith.constant 0 : index
    %c0_3 = arith.constant 0 : index
    %c0_4 = arith.constant 0 : index
    %3 = vector.load %arg2[%c0_2, %c0_3, %c0_4] : memref<3x128x256xf32, #tpu.memory_space<vmem>>, vector<1x128x256xf32>
    %4 = vector.shape_cast %3 : vector<1x128x256xf32> to vector<128x256xf32>
    %cst = arith.constant dense<0.000000e+00> : vector<16x256xf32>
    %5 = tpu.matmul %2, %4, %cst {dimension_numbers = #tpu.dot_dimension_numbers<[1], [0], [0], [1], [0, 0, 1, 1], [], []>} : vector<16x128xf32>, vector<128x256xf32>, vector<16x256xf32> -> vector<16x256xf32>
    %c0_5 = arith.constant 0 : index
    %c0_6 = arith.constant 0 : index
    %c0_7 = arith.constant 0 : index
    %6 = vector.load %arg4[%c0_5, %c0_6, %c0_7] : memref<3x128x256xf32, #tpu.memory_space<vmem>>, vector<1x128x256xf32>
    %7 = vector.shape_cast %6 : vector<1x128x256xf32> to vector<128x256xf32>
    %cst_8 = arith.constant dense<0.000000e+00> : vector<16x256xf32>
    %8 = tpu.matmul %2, %7, %cst_8 {dimension_numbers = #tpu.dot_dimension_numbers<[1], [0], [0], [1], [0, 0, 1, 1], [], []>} : vector<16x128xf32>, vector<128x256xf32>, vector<16x256xf32> -> vector<16x256xf32>
    %9 = vector.extract_strided_slice %0 {offsets = [0, 1, 0], sizes = [2, 8, 128], strides = [1, 1, 1]} : vector<2x10x128xf32> to vector<2x8x128xf32>
    %10 = vector.shape_cast %9 : vector<2x8x128xf32> to vector<16x128xf32>
    %c1 = arith.constant 1 : index
    %c0_9 = arith.constant 0 : index
    %c0_10 = arith.constant 0 : index
    %11 = vector.load %arg2[%c1, %c0_9, %c0_10] : memref<3x128x256xf32, #tpu.memory_space<vmem>>, vector<1x128x256xf32>
    %12 = vector.shape_cast %11 : vector<1x128x256xf32> to vector<128x256xf32>
    %cst_11 = arith.constant dense<0.000000e+00> : vector<16x256xf32>
    %13 = tpu.matmul %10, %12, %cst_11 {dimension_numbers = #tpu.dot_dimension_numbers<[1], [0], [0], [1], [0, 0, 1, 1], [], []>} : vector<16x128xf32>, vector<128x256xf32>, vector<16x256xf32> -> vector<16x256xf32>
    %14 = arith.addf %5, %13 : vector<16x256xf32>
    %c1_12 = arith.constant 1 : index
    %c0_13 = arith.constant 0 : index
    %c0_14 = arith.constant 0 : index
    %15 = vector.load %arg4[%c1_12, %c0_13, %c0_14] : memref<3x128x256xf32, #tpu.memory_space<vmem>>, vector<1x128x256xf32>
    %16 = vector.shape_cast %15 : vector<1x128x256xf32> to vector<128x256xf32>
    %cst_15 = arith.constant dense<0.000000e+00> : vector<16x256xf32>
    %17 = tpu.matmul %10, %16, %cst_15 {dimension_numbers = #tpu.dot_dimension_numbers<[1], [0], [0], [1], [0, 0, 1, 1], [], []>} : vector<16x128xf32>, vector<128x256xf32>, vector<16x256xf32> -> vector<16x256xf32>
    %18 = arith.addf %8, %17 : vector<16x256xf32>
    %19 = vector.extract_strided_slice %0 {offsets = [0, 2, 0], sizes = [2, 8, 128], strides = [1, 1, 1]} : vector<2x10x128xf32> to vector<2x8x128xf32>
    %20 = vector.shape_cast %19 : vector<2x8x128xf32> to vector<16x128xf32>
    %c2 = arith.constant 2 : index
    %c0_16 = arith.constant 0 : index
    %c0_17 = arith.constant 0 : index
    %21 = vector.load %arg2[%c2, %c0_16, %c0_17] : memref<3x128x256xf32, #tpu.memory_space<vmem>>, vector<1x128x256xf32>
    %22 = vector.shape_cast %21 : vector<1x128x256xf32> to vector<128x256xf32>
    %cst_18 = arith.constant dense<0.000000e+00> : vector<16x256xf32>
    %23 = tpu.matmul %20, %22, %cst_18 {dimension_numbers = #tpu.dot_dimension_numbers<[1], [0], [0], [1], [0, 0, 1, 1], [], []>} : vector<16x128xf32>, vector<128x256xf32>, vector<16x256xf32> -> vector<16x256xf32>
    %24 = arith.addf %14, %23 : vector<16x256xf32>
    %c2_19 = arith.constant 2 : index
    %c0_20 = arith.constant 0 : index
    %c0_21 = arith.constant 0 : index
    %25 = vector.load %arg4[%c2_19, %c0_20, %c0_21] : memref<3x128x256xf32, #tpu.memory_space<vmem>>, vector<1x128x256xf32>
    %26 = vector.shape_cast %25 : vector<1x128x256xf32> to vector<128x256xf32>
    %cst_22 = arith.constant dense<0.000000e+00> : vector<16x256xf32>
    %27 = tpu.matmul %20, %26, %cst_22 {dimension_numbers = #tpu.dot_dimension_numbers<[1], [0], [0], [1], [0, 0, 1, 1], [], []>} : vector<16x128xf32>, vector<128x256xf32>, vector<16x256xf32> -> vector<16x256xf32>
    %28 = arith.addf %18, %27 : vector<16x256xf32>
    %c0_23 = arith.constant 0 : index
    %c0_24 = arith.constant 0 : index
    %29 = vector.load %arg3[%c0_23, %c0_24] : memref<1x256xf32, #tpu.memory_space<vmem>>, vector<1x256xf32>
    %30 = vector.broadcast %29 : vector<1x256xf32> to vector<16x256xf32>
    %31 = arith.addf %24, %30 : vector<16x256xf32>
    %c0_25 = arith.constant 0 : index
    %c0_26 = arith.constant 0 : index
    %32 = vector.load %arg5[%c0_25, %c0_26] : memref<1x256xf32, #tpu.memory_space<vmem>>, vector<1x256xf32>
    %33 = vector.broadcast %32 : vector<1x256xf32> to vector<16x256xf32>
    %34 = arith.addf %28, %33 : vector<16x256xf32>
    %35 = arith.negf %34 : vector<16x256xf32>
    %36 = math.exp %35 : vector<16x256xf32>
    %cst_27 = arith.constant 1.000000e+00 : f32
    %37 = vector.broadcast %cst_27 : f32 to vector<16x256xf32>
    %38 = arith.addf %37, %36 : vector<16x256xf32>
    %39 = arith.divf %37, %38 : vector<16x256xf32>
    %40 = arith.mulf %31, %39 : vector<16x256xf32>
    %cst_28 = arith.constant dense<0.000000e+00> : vector<16xf32>
    %41 = vector.multi_reduction <add>, %40, %cst_28 [1] : vector<16x256xf32> to vector<16xf32>
    %42 = vector.shape_cast %41 : vector<16xf32> to vector<16x1xf32>
    %43 = arith.mulf %40, %40 : vector<16x256xf32>
    %cst_29 = arith.constant dense<0.000000e+00> : vector<16xf32>
    %44 = vector.multi_reduction <add>, %43, %cst_29 [1] : vector<16x256xf32> to vector<16xf32>
    %45 = vector.shape_cast %44 : vector<16xf32> to vector<16x1xf32>
    %cst_30 = arith.constant 3.906250e-03 : f32
    %46 = vector.broadcast %cst_30 : f32 to vector<16x1xf32>
    %47 = arith.mulf %42, %46 : vector<16x1xf32>
    %cst_31 = arith.constant 3.906250e-03 : f32
    %48 = vector.broadcast %cst_31 : f32 to vector<16x1xf32>
    %49 = arith.mulf %45, %48 : vector<16x1xf32>
    %50 = arith.mulf %47, %47 : vector<16x1xf32>
    %51 = arith.subf %49, %50 : vector<16x1xf32>
    %cst_32 = arith.constant 0.000000e+00 : f32
    %52 = vector.broadcast %cst_32 : f32 to vector<16x1xf32>
    %53 = arith.maximumf %51, %52 : vector<16x1xf32>
    %54 = vector.broadcast %47 : vector<16x1xf32> to vector<16x256xf32>
    %55 = arith.subf %40, %54 : vector<16x256xf32>
    %cst_33 = arith.constant 9.99999974E-6 : f32
    %56 = vector.broadcast %cst_33 : f32 to vector<16x1xf32>
    %57 = arith.addf %53, %56 : vector<16x1xf32>
    %58 = math.rsqrt %57 : vector<16x1xf32>
    %59 = vector.broadcast %58 : vector<16x1xf32> to vector<16x256xf32>
    %60 = arith.mulf %55, %59 : vector<16x256xf32>
    %c0_34 = arith.constant 0 : index
    %c0_35 = arith.constant 0 : index
    %61 = vector.load %arg6[%c0_34, %c0_35] : memref<1x256xf32, #tpu.memory_space<vmem>>, vector<1x256xf32>
    %62 = vector.broadcast %61 : vector<1x256xf32> to vector<16x256xf32>
    %63 = arith.mulf %60, %62 : vector<16x256xf32>
    %c0_36 = arith.constant 0 : index
    %c0_37 = arith.constant 0 : index
    %64 = vector.load %arg7[%c0_36, %c0_37] : memref<1x256xf32, #tpu.memory_space<vmem>>, vector<1x256xf32>
    %65 = vector.broadcast %64 : vector<1x256xf32> to vector<16x256xf32>
    %66 = arith.addf %63, %65 : vector<16x256xf32>
    %c0_38 = arith.constant 0 : index
    %c0_39 = arith.constant 0 : index
    %67 = vector.load %arg8[%c0_38, %c0_39] : memref<256x128xf32, #tpu.memory_space<vmem>>, vector<256x128xf32>
    %cst_40 = arith.constant dense<0.000000e+00> : vector<16x128xf32>
    %68 = tpu.matmul %66, %67, %cst_40 {dimension_numbers = #tpu.dot_dimension_numbers<[1], [0], [0], [1], [0, 0, 1, 1], [], []>} : vector<16x256xf32>, vector<256x128xf32>, vector<16x128xf32> -> vector<16x128xf32>
    %c0_41 = arith.constant 0 : index
    %c0_42 = arith.constant 0 : index
    %69 = vector.load %arg9[%c0_41, %c0_42] : memref<1x128xf32, #tpu.memory_space<vmem>>, vector<1x128xf32>
    %70 = vector.broadcast %69 : vector<1x128xf32> to vector<16x128xf32>
    %71 = arith.addf %68, %70 : vector<16x128xf32>
    %cst_43 = arith.constant 0.000000e+00 : f32
    %72 = vector.broadcast %cst_43 : f32 to vector<16x128xf32>
    %73 = arith.maximumf %71, %72 : vector<16x128xf32>
    %c0_44 = arith.constant 0 : index
    %c0_45 = arith.constant 0 : index
    %74 = vector.load %arg10[%c0_44, %c0_45] : memref<128x128xf32, #tpu.memory_space<vmem>>, vector<128x128xf32>
    %cst_46 = arith.constant dense<0.000000e+00> : vector<16x128xf32>
    %75 = tpu.matmul %73, %74, %cst_46 {dimension_numbers = #tpu.dot_dimension_numbers<[1], [0], [0], [1], [0, 0, 1, 1], [], []>} : vector<16x128xf32>, vector<128x128xf32>, vector<16x128xf32> -> vector<16x128xf32>
    %c0_47 = arith.constant 0 : index
    %c0_48 = arith.constant 0 : index
    %76 = vector.load %arg11[%c0_47, %c0_48] : memref<1x128xf32, #tpu.memory_space<vmem>>, vector<1x128xf32>
    %77 = vector.broadcast %76 : vector<1x128xf32> to vector<16x128xf32>
    %78 = arith.addf %75, %77 : vector<16x128xf32>
    %c0_49 = arith.constant 0 : index
    %c0_50 = arith.constant 0 : index
    %79 = vector.load %arg12[%c0_49, %c0_50] : memref<16x128xf32, #tpu.memory_space<vmem>>, vector<16x128xf32>
    tpu.vector_store %arg12[%c0_49, %c0_50], %78 {strides = array<i32>} : memref<16x128xf32, #tpu.memory_space<vmem>>, vector<16x128xf32>,
    return
  }
  func.func @transform_0(%arg0: i32) -> (i32, i32, i32) {
    %c0_i32 = arith.constant 0 : i32
    %c0_i32_0 = arith.constant 0 : i32
    %c0_i32_1 = arith.constant 0 : i32
    return %arg0, %c0_i32, %c0_i32_0 : i32, i32, i32
  }
  func.func @transform_1(%arg0: i32) -> (i32, i32, i32) {
    %c0_i32 = arith.constant 0 : i32
    %c0_i32_0 = arith.constant 0 : i32
    %c0_i32_1 = arith.constant 0 : i32
    %c0_i32_2 = arith.constant 0 : i32
    return %c0_i32, %c0_i32_0, %c0_i32_1 : i32, i32, i32
  }
  func.func @transform_2(%arg0: i32) -> (i32, i32) {
    %c0_i32 = arith.constant 0 : i32
    %c0_i32_0 = arith.constant 0 : i32
    %c0_i32_1 = arith.constant 0 : i32
    return %c0_i32, %c0_i32_0 : i32, i32
  }
  func.func @transform_3(%arg0: i32) -> (i32, i32, i32) {
    %c0_i32 = arith.constant 0 : i32
    %c0_i32_0 = arith.constant 0 : i32
    %c0_i32_1 = arith.constant 0 : i32
    %c0_i32_2 = arith.constant 0 : i32
    return %c0_i32, %c0_i32_0, %c0_i32_1 : i32, i32, i32
  }
  func.func @transform_4(%arg0: i32) -> (i32, i32) {
    %c0_i32 = arith.constant 0 : i32
    %c0_i32_0 = arith.constant 0 : i32
    %c0_i32_1 = arith.constant 0 : i32
    return %c0_i32, %c0_i32_0 : i32, i32
  }
  func.func @transform_5(%arg0: i32) -> (i32, i32) {
    %c0_i32 = arith.constant 0 : i32
    %c0_i32_0 = arith.constant 0 : i32
    %c0_i32_1 = arith.constant 0 : i32
    return %c0_i32, %c0_i32_0 : i32, i32
  }
  func.func @transform_6(%arg0: i32) -> (i32, i32) {
    %c0_i32 = arith.constant 0 : i32
    %c0_i32_0 = arith.constant 0 : i32
    %c0_i32_1 = arith.constant 0 : i32
    return %c0_i32, %c0_i32_0 : i32, i32
  }
  func.func @transform_7(%arg0: i32) -> (i32, i32) {
    %c0_i32 = arith.constant 0 : i32
    %c0_i32_0 = arith.constant 0 : i32
    %c0_i32_1 = arith.constant 0 : i32
    return %c0_i32, %c0_i32_0 : i32, i32
  }
  func.func @transform_8(%arg0: i32) -> (i32, i32) {
    %c0_i32 = arith.constant 0 : i32
    %c0_i32_0 = arith.constant 0 : i32
    %c0_i32_1 = arith.constant 0 : i32
    return %c0_i32, %c0_i32_0 : i32, i32
  }
  func.func @transform_9(%arg0: i32) -> (i32, i32) {
    %c0_i32 = arith.constant 0 : i32
    %c0_i32_0 = arith.constant 0 : i32
    %c0_i32_1 = arith.constant 0 : i32
    return %c0_i32, %c0_i32_0 : i32, i32
  }
  func.func @transform_10(%arg0: i32) -> (i32, i32) {
    %c0_i32 = arith.constant 0 : i32
    %c0_i32_0 = arith.constant 0 : i32
    %c0_i32_1 = arith.constant 0 : i32
    return %c0_i32, %c0_i32_0 : i32, i32
  }
  func.func @transform_11(%arg0: i32) -> (i32, i32) {
    %c0_i32 = arith.constant 0 : i32
    %c0_i32_0 = arith.constant 0 : i32
    return %arg0, %c0_i32 : i32, i32
  }
}

</mosaic_0001>

<llo_original>
// kernel: tpu_custom_call.1
$region0: #{tpu_custom_call.1}
  #allocation0 [shape = 'u32[]', space=smem, size = 0x4, offset = 0x4, fixed_abs, tag = 'smem constant byte address 0x4 - core index']
  #allocation1 [shape = 'u32[72,128]{1,0:T(1,128)}', space=vmem, size = 0x9000, scoped, tag = 'internal scratch']
  %s0 = inlined_call_operand.vmem [shape: f32[2,10,128], index: 0, kind: input, shape index: {}]
  %s1 = inlined_call_operand.hbm [shape: f32[3,128,256], index: 1, kind: input, shape index: {}]
  %s2 = inlined_call_operand.vmem [shape: f32[1,256], index: 2, kind: input, shape index: {}]
  %s3 = inlined_call_operand.hbm [shape: f32[3,128,256], index: 3, kind: input, shape index: {}]
  %s4 = inlined_call_operand.vmem [shape: f32[1,256], index: 4, kind: input, shape index: {}]
  %s5 = inlined_call_operand.vmem [shape: f32[1,256], index: 5, kind: input, shape index: {}]
  %s6 = inlined_call_operand.vmem [shape: f32[1,256], index: 6, kind: input, shape index: {}]
  %s7 = inlined_call_operand.hbm [shape: f32[256,128], index: 7, kind: input, shape index: {}]
  %s8 = inlined_call_operand.vmem [shape: f32[1,128], index: 8, kind: input, shape index: {}]
  %s9 = inlined_call_operand.hbm [shape: f32[128,128], index: 9, kind: input, shape index: {}]
  %s10 = inlined_call_operand.vmem [shape: f32[1,128], index: 10, kind: input, shape index: {}]
  %s11 = inlined_call_operand.hbm [shape: f32[16,128], index: 11, kind: output, shape index: {}]
  %s12 = sld [smem:[#allocation0]]
  $region70: #{tpu_custom_call.1} parent=0
    _
  %s14 = ssub.s32 1, %s12
  %s15 = scalar_select 0, %s14, %s12
  $region1: #{tpu_custom_call.1} parent=0
    #allocation2 [shape = 'u8[393216]{0}', space=vmem, size = 0x60000, scoped, tag = 'input window, operand 1, single buffered']
    #allocation3 [shape = 's32[1]{0}', space=sflag, size = 0x4, scoped, tag = 'scoped memory for tpu_custom_call.1']
    #allocation4 [shape = 's32[1]{0}', space=sflag, size = 0x4, scoped, tag = 'scoped memory for tpu_custom_call.1']
    #allocation5 [shape = 'u8[393216]{0}', space=vmem, size = 0x60000, scoped, tag = 'input window, operand 3, single buffered']
    #allocation6 [shape = 's32[1]{0}', space=sflag, size = 0x4, scoped, tag = 'scoped memory for tpu_custom_call.1']
    #allocation7 [shape = 'u8[131072]{0}', space=vmem, size = 0x20000, scoped, tag = 'input window, operand 7, single buffered']
    #allocation8 [shape = 'u8[65536]{0}', space=vmem, size = 0x10000, scoped, tag = 'input window, operand 9, single buffered']
    #allocation9 [shape = 's32[1]{0}', space=sflag, size = 0x4, scoped, tag = 'scoped memory for tpu_custom_call.1']
    #allocation10 [shape = 'u8[8192]{0}', space=vmem, size = 0x2000, scoped, tag = 'output window, operand 0, single buffered']
    %16 = vsyncpa [#allocation3], 0
    %17 = vsyncpa [#allocation6], 0
    %18 = vsyncpa [#allocation9], 0
    %19 = vsyncpa [#allocation4], 0
    // Predicated region
    $region2: #{tpu_custom_call.1} parent=1 // pred_check
      _
    $region3: #{tpu_custom_call.1} parent=1 // pred_check_branch
      %21 = sbr.rel (0) target = $region5
    $region4: #{tpu_custom_call.1} parent=1 // pred_region
      _
    $region5: #{tpu_custom_call.1} parent=1 // pred_fallthru
      _
    // Predicated region
    $region6: #{tpu_custom_call.1} parent=1 // pred_check
      _
    $region7: #{tpu_custom_call.1} parent=1 // pred_check_branch
      %23 = sbr.rel (0) target = $region9
    $region8: #{tpu_custom_call.1} parent=1 // pred_region
      %25 = vsyncadd [#allocation3], 0
      %s26 = sshll.u32 %s1, 4
      %s27 = int_to_ptr.hbm [resolvable:$true] %s26
      %s28 = sshll.u32 [#allocation2], 4
      %s29 = int_to_ptr.vmem [resolvable:$true] %s28
      %34 = dma.hbm_to_vmem [thread:$0]  %s27, 12288, %s29, [#allocation3], 256, 256, 16
    $region9: #{tpu_custom_call.1} parent=1 // pred_fallthru
      _
    // Predicated region
    $region10: #{tpu_custom_call.1} parent=1 // pred_check
      _
    $region11: #{tpu_custom_call.1} parent=1 // pred_check_branch
      %36 = sbr.rel (0) target = $region13
    $region12: #{tpu_custom_call.1} parent=1 // pred_region
      _
    $region13: #{tpu_custom_call.1} parent=1 // pred_fallthru
      _
    // Predicated region
    $region14: #{tpu_custom_call.1} parent=1 // pred_check
      _
    $region15: #{tpu_custom_call.1} parent=1 // pred_check_branch
      %38 = sbr.rel (0) target = $region17
    $region16: #{tpu_custom_call.1} parent=1 // pred_region
      %40 = vsyncadd [#allocation6], 0
      %s41 = sshll.u32 %s3, 4
      %s42 = int_to_ptr.hbm [resolvable:$true] %s41
      %s43 = sshll.u32 [#allocation5], 4
      %s44 = int_to_ptr.vmem [resolvable:$true] %s43
      %49 = dma.hbm_to_vmem [thread:$0]  %s42, 12288, %s44, [#allocation6], 256, 256, 16
    $region17: #{tpu_custom_call.1} parent=1 // pred_fallthru
      _
    // Predicated region
    $region18: #{tpu_custom_call.1} parent=1 // pred_check
      _
    $region19: #{tpu_custom_call.1} parent=1 // pred_check_branch
      %51 = sbr.rel (0) target = $region21
    $region20: #{tpu_custom_call.1} parent=1 // pred_region
      _
    $region21: #{tpu_custom_call.1} parent=1 // pred_fallthru
      _
    // Predicated region
    $region22: #{tpu_custom_call.1} parent=1 // pred_check
      _
    $region23: #{tpu_custom_call.1} parent=1 // pred_check_branch
      %53 = sbr.rel (0) target = $region25
    $region24: #{tpu_custom_call.1} parent=1 // pred_region
      _
    $region25: #{tpu_custom_call.1} parent=1 // pred_fallthru
      _
    // Predicated region
    $region26: #{tpu_custom_call.1} parent=1 // pred_check
      _
    $region27: #{tpu_custom_call.1} parent=1 // pred_check_branch
      %55 = sbr.rel (0) target = $region29
    $region28: #{tpu_custom_call.1} parent=1 // pred_region
      _
    $region29: #{tpu_custom_call.1} parent=1 // pred_fallthru
      _
    // Predicated region
    $region30: #{tpu_custom_call.1} parent=1 // pred_check
      _
    $region31: #{tpu_custom_call.1} parent=1 // pred_check_branch
      %57 = sbr.rel (0) target = $region33
    $region32: #{tpu_custom_call.1} parent=1 // pred_region
      %59 = vsyncadd [#allocation6], 0
      %s60 = sshll.u32 %s7, 4
      %s61 = int_to_ptr.hbm [resolvable:$true] %s60
      %s62 = sshll.u32 [#allocation7], 4
      %s63 = int_to_ptr.vmem [resolvable:$true] %s62
      %68 = dma.hbm_to_vmem [thread:$0]  %s61, 4096, %s63, [#allocation6], 128, 128, 8
    $region33: #{tpu_custom_call.1} parent=1 // pred_fallthru
      _
    // Predicated region
    $region34: #{tpu_custom_call.1} parent=1 // pred_check
      _
    $region35: #{tpu_custom_call.1} parent=1 // pred_check_branch
      %70 = sbr.rel (0) target = $region37
    $region36: #{tpu_custom_call.1} parent=1 // pred_region
      _
    $region37: #{tpu_custom_call.1} parent=1 // pred_fallthru
      _
    // Predicated region
    $region38: #{tpu_custom_call.1} parent=1 // pred_check
      _
    $region39: #{tpu_custom_call.1} parent=1 // pred_check_branch
      %72 = sbr.rel (0) target = $region41
    $region40: #{tpu_custom_call.1} parent=1 // pred_region
      %74 = vsyncadd [#allocation9], 0
      %s75 = sshll.u32 %s9, 4
      %s76 = int_to_ptr.hbm [resolvable:$true] %s75
      %s77 = sshll.u32 [#allocation8], 4
      %s78 = int_to_ptr.vmem [resolvable:$true] %s77
      %83 = dma.hbm_to_vmem [thread:$0]  %s76, 2048, %s78, [#allocation9], 128, 128, 8
    $region41: #{tpu_custom_call.1} parent=1 // pred_fallthru
      _
    // Predicated region
    $region42: #{tpu_custom_call.1} parent=1 // pred_check
      _
    $region43: #{tpu_custom_call.1} parent=1 // pred_check_branch
      %85 = sbr.rel (0) target = $region45
    $region44: #{tpu_custom_call.1} parent=1 // pred_region
      _
    $region45: #{tpu_custom_call.1} parent=1 // pred_fallthru
      _
    // Predicated region
    $region46: #{tpu_custom_call.1} parent=1 // pred_check
      _
    $region47: #{tpu_custom_call.1} parent=1 // pred_check_branch
      %87 = sbr.rel (0) target = $region49
    $region48: #{tpu_custom_call.1} parent=1 // pred_region
      %89 = dma.done [#allocation3], 12288
    $region49: #{tpu_custom_call.1} parent=1 // pred_fallthru
      _
    // Predicated region
    $region50: #{tpu_custom_call.1} parent=1 // pred_check
      _
    $region51: #{tpu_custom_call.1} parent=1 // pred_check_branch
      %91 = sbr.rel (0) target = $region53
    $region52: #{tpu_custom_call.1} parent=1 // pred_region
      %93 = dma.done [#allocation6], 12288
    $region53: #{tpu_custom_call.1} parent=1 // pred_fallthru
      _
    // Predicated region
    $region54: #{tpu_custom_call.1} parent=1 // pred_check
      _
    $region55: #{tpu_custom_call.1} parent=1 // pred_check_branch
      %95 = sbr.rel (0) target = $region57
    $region56: #{tpu_custom_call.1} parent=1 // pred_region
      %97 = dma.done [#allocation6], 4096
    $region57: #{tpu_custom_call.1} parent=1 // pred_fallthru
      _
    // Predicated region
    $region58: #{tpu_custom_call.1} parent=1 // pred_check
      _
    $region59: #{tpu_custom_call.1} parent=1 // pred_check_branch
      %99 = sbr.rel (0) target = $region61
    $region60: #{tpu_custom_call.1} parent=1 // pred_region
      %101 = dma.done [#allocation9], 2048
    $region61: #{tpu_custom_call.1} parent=1 // pred_fallthru
      _
    %v102 = vld [vmem:[%s0] sm:$0xff]
    %v103 = vld [vmem:[%s0 + $0x8] sm:$0x3]
    %v104 = vld [vmem:[%s0 + $0x10] sm:$0xff]
    %v105 = vld [vmem:[%s0 + $0x18] sm:$0x3]
    %v106 = vld [vmem:[#allocation2] sm:$0xff]
    %v107 = vld [vmem:[#allocation2 + $0x8] sm:$0xff]
    %v108 = vld [vmem:[#allocation2 + $0x10] sm:$0xff]
    %v109 = vld [vmem:[#allocation2 + $0x18] sm:$0xff]
    %v110 = vld [vmem:[#allocation2 + $0x20] sm:$0xff]
    %v111 = vld [vmem:[#allocation2 + $0x28] sm:$0xff]
    %v112 = vld [vmem:[#allocation2 + $0x30] sm:$0xff]
    %v113 = vld [vmem:[#allocation2 + $0x38] sm:$0xff]
    %v114 = vld [vmem:[#allocation2 + $0x40] sm:$0xff]
    %v115 = vld [vmem:[#allocation2 + $0x48] sm:$0xff]
    %v116 = vld [vmem:[#allocation2 + $0x50] sm:$0xff]
    %v117 = vld [vmem:[#allocation2 + $0x58] sm:$0xff]
    %v118 = vld [vmem:[#allocation2 + $0x60] sm:$0xff]
    %v119 = vld [vmem:[#allocation2 + $0x68] sm:$0xff]
    %v120 = vld [vmem:[#allocation2 + $0x70] sm:$0xff]
    %v121 = vld [vmem:[#allocation2 + $0x78] sm:$0xff]
    %v122 = vld [vmem:[#allocation2 + $0x80] sm:$0xff]
    %v123 = vld [vmem:[#allocation2 + $0x88] sm:$0xff]
    %v124 = vld [vmem:[#allocation2 + $0x90] sm:$0xff]
    %v125 = vld [vmem:[#allocation2 + $0x98] sm:$0xff]
    %v126 = vld [vmem:[#allocation2 + $0xa0] sm:$0xff]
    %v127 = vld [vmem:[#allocation2 + $0xa8] sm:$0xff]
    %v128 = vld [vmem:[#allocation2 + $0xb0] sm:$0xff]
    %v129 = vld [vmem:[#allocation2 + $0xb8] sm:$0xff]
    %v130 = vld [vmem:[#allocation2 + $0xc0] sm:$0xff]
    %v131 = vld [vmem:[#allocation2 + $0xc8] sm:$0xff]
    %v132 = vld [vmem:[#allocation2 + $0xd0] sm:$0xff]
    %v133 = vld [vmem:[#allocation2 + $0xd8] sm:$0xff]
    %v134 = vld [vmem:[#allocation2 + $0xe0] sm:$0xff]
    %v135 = vld [vmem:[#allocation2 + $0xe8] sm:$0xff]
    %v136 = vld [vmem:[#allocation2 + $0xf0] sm:$0xff]
    %v137 = vld [vmem:[#allocation2 + $0xf8] sm:$0xff]
    %v138 = vld [vmem:[#allocation5] sm:$0xff]
    %v139 = vld [vmem:[#allocation5 + $0x8] sm:$0xff]
    %v140 = vld [vmem:[#allocation5 + $0x10] sm:$0xff]
    %v141 = vld [vmem:[#allocation5 + $0x18] sm:$0xff]
    %v142 = vld [vmem:[#allocation5 + $0x20] sm:$0xff]
    %v143 = vld [vmem:[#allocation5 + $0x28] sm:$0xff]
    %v144 = vld [vmem:[#allocation5 + $0x30] sm:$0xff]
    %v145 = vld [vmem:[#allocation5 + $0x38] sm:$0xff]
    %v146 = vld [vmem:[#allocation5 + $0x40] sm:$0xff]
    %v147 = vld [vmem:[#allocation5 + $0x48] sm:$0xff]
    %v148 = vld [vmem:[#allocation5 + $0x50] sm:$0xff]
    %v149 = vld [vmem:[#allocation5 + $0x58] sm:$0xff]
    %v150 = vld [vmem:[#allocation5 + $0x60] sm:$0xff]
    %v151 = vld [vmem:[#allocation5 + $0x68] sm:$0xff]
    %v152 = vld [vmem:[#allocation5 + $0x70] sm:$0xff]
    %v153 = vld [vmem:[#allocation5 + $0x78] sm:$0xff]
    %v154 = vld [vmem:[#allocation5 + $0x80] sm:$0xff]
    %v155 = vld [vmem:[#allocation5 + $0x88] sm:$0xff]
    %v156 = vld [vmem:[#allocation5 + $0x90] sm:$0xff]
    %v157 = vld [vmem:[#allocation5 + $0x98] sm:$0xff]
    %v158 = vld [vmem:[#allocation5 + $0xa0] sm:$0xff]
    %v159 = vld [vmem:[#allocation5 + $0xa8] sm:$0xff]
    %v160 = vld [vmem:[#allocation5 + $0xb0] sm:$0xff]
    %v161 = vld [vmem:[#allocation5 + $0xb8] sm:$0xff]
    %v162 = vld [vmem:[#allocation5 + $0xc0] sm:$0xff]
    %v163 = vld [vmem:[#allocation5 + $0xc8] sm:$0xff]
    %v164 = vld [vmem:[#allocation5 + $0xd0] sm:$0xff]
    %v165 = vld [vmem:[#allocation5 + $0xd8] sm:$0xff]
    %v166 = vld [vmem:[#allocation5 + $0xe0] sm:$0xff]
    %v167 = vld [vmem:[#allocation5 + $0xe8] sm:$0xff]
    %v168 = vld [vmem:[#allocation5 + $0xf0] sm:$0xff]
    %v169 = vld [vmem:[#allocation5 + $0xf8] sm:$0xff]
    %vm174 = vcmask 1046528
    %v175 = vrot.slane %v102, 1
    %v176 = vrot.slane %v103, 1
    %v177 = vsel %vm174, %v175, %v176
    %v178 = vrot.slane %v104, 1
    %v179 = vrot.slane %v105, 1
    %v180 = vsel %vm174, %v178, %v179
    %s183 = scalar_lea.vmem [#allocation2], 256
    %v184 = vld [vmem:[%s183] sm:$0xff]
    %v185 = vld [vmem:[%s183 + $0x8] sm:$0xff]
    %v186 = vld [vmem:[%s183 + $0x10] sm:$0xff]
    %v187 = vld [vmem:[%s183 + $0x18] sm:$0xff]
    %v188 = vld [vmem:[%s183 + $0x20] sm:$0xff]
    %v189 = vld [vmem:[%s183 + $0x28] sm:$0xff]
    %v190 = vld [vmem:[%s183 + $0x30] sm:$0xff]
    %v191 = vld [vmem:[%s183 + $0x38] sm:$0xff]
    %v192 = vld [vmem:[%s183 + $0x40] sm:$0xff]
    %v193 = vld [vmem:[%s183 + $0x48] sm:$0xff]
    %v194 = vld [vmem:[%s183 + $0x50] sm:$0xff]
    %v195 = vld [vmem:[%s183 + $0x58] sm:$0xff]
    %v196 = vld [vmem:[%s183 + $0x60] sm:$0xff]
    %v197 = vld [vmem:[%s183 + $0x68] sm:$0xff]
    %v198 = vld [vmem:[%s183 + $0x70] sm:$0xff]
    %v199 = vld [vmem:[%s183 + $0x78] sm:$0xff]
    %v200 = vld [vmem:[%s183 + $0x80] sm:$0xff]
    %v201 = vld [vmem:[%s183 + $0x88] sm:$0xff]
    %v202 = vld [vmem:[%s183 + $0x90] sm:$0xff]
    %v203 = vld [vmem:[%s183 + $0x98] sm:$0xff]
    %v204 = vld [vmem:[%s183 + $0xa0] sm:$0xff]
    %v205 = vld [vmem:[%s183 + $0xa8] sm:$0xff]
    %v206 = vld [vmem:[%s183 + $0xb0] sm:$0xff]
    %v207 = vld [vmem:[%s183 + $0xb8] sm:$0xff]
    %v208 = vld [vmem:[%s183 + $0xc0] sm:$0xff]
    %v209 = vld [vmem:[%s183 + $0xc8] sm:$0xff]
    %v210 = vld [vmem:[%s183 + $0xd0] sm:$0xff]
    %v211 = vld [vmem:[%s183 + $0xd8] sm:$0xff]
    %v212 = vld [vmem:[%s183 + $0xe0] sm:$0xff]
    %v213 = vld [vmem:[%s183 + $0xe8] sm:$0xff]
    %v214 = vld [vmem:[%s183 + $0xf0] sm:$0xff]
    %v215 = vld [vmem:[%s183 + $0xf8] sm:$0xff]
    %216 = vmatpush.msra.mxu0 %v214
    %217 = vmatpush.msra.mxu0 %v212
    %218 = vmatpush.msra.mxu0 %v210
    %219 = vmatpush.msra.mxu0 %v208
    %220 = vmatpush.msra.mxu0 %v206
    %221 = vmatpush.msra.mxu0 %v204
    %222 = vmatpush.msra.mxu0 %v202
    %223 = vmatpush.msra.mxu0 %v200
    %224 = vmatpush.msra.mxu0 %v198
    %225 = vmatpush.msra.mxu0 %v196
    %226 = vmatpush.msra.mxu0 %v194
    %227 = vmatpush.msra.mxu0 %v192
    %228 = vmatpush.msra.mxu0 %v190
    %229 = vmatpush.msra.mxu0 %v188
    %230 = vmatpush.msra.mxu0 %v186
    %231 = vmatpush.msra.mxu0 %v184
    %232 = vmatmul.f32.gmra.mxu0 %v177
    %v233 = vpop.f32.mrf.mxu0
    %v234 = vadd.f32 0.0, %v233
    %235 = vmatmul.f32.gmra.mxu0 %v180
    %v236 = vpop.f32.mrf.mxu0
    %v237 = vadd.f32 0.0, %v236
    %238 = vdwg.mxu0
    %239 = vmatpush.msra.mxu0 %v215
    %240 = vmatpush.msra.mxu0 %v213
    %241 = vmatpush.msra.mxu0 %v211
    %242 = vmatpush.msra.mxu0 %v209
    %243 = vmatpush.msra.mxu0 %v207
    %244 = vmatpush.msra.mxu0 %v205
    %245 = vmatpush.msra.mxu0 %v203
    %246 = vmatpush.msra.mxu0 %v201
    %247 = vmatpush.msra.mxu0 %v199
    %248 = vmatpush.msra.mxu0 %v197
    %249 = vmatpush.msra.mxu0 %v195
    %250 = vmatpush.msra.mxu0 %v193
    %251 = vmatpush.msra.mxu0 %v191
    %252 = vmatpush.msra.mxu0 %v189
    %253 = vmatpush.msra.mxu0 %v187
    %254 = vmatpush.msra.mxu0 %v185
    %255 = vmatmul.f32.gmra.mxu0 %v177
    %v256 = vpop.f32.mrf.mxu0
    %v257 = vadd.f32 0.0, %v256
    %258 = vmatmul.f32.gmra.mxu0 %v180
    %v259 = vpop.f32.mrf.mxu0
    %v260 = vadd.f32 0.0, %v259
    %261 = vdwg.mxu0
    %262 = vmatpush.msra.mxu0 %v136
    %263 = vmatpush.msra.mxu0 %v134
    %264 = vmatpush.msra.mxu0 %v132
    %265 = vmatpush.msra.mxu0 %v130
    %266 = vmatpush.msra.mxu0 %v128
    %267 = vmatpush.msra.mxu0 %v126
    %268 = vmatpush.msra.mxu0 %v124
    %269 = vmatpush.msra.mxu0 %v122
    %270 = vmatpush.msra.mxu0 %v120
    %271 = vmatpush.msra.mxu0 %v118
    %272 = vmatpush.msra.mxu0 %v116
    %273 = vmatpush.msra.mxu0 %v114
    %274 = vmatpush.msra.mxu0 %v112
    %275 = vmatpush.msra.mxu0 %v110
    %276 = vmatpush.msra.mxu0 %v108
    %277 = vmatpush.msra.mxu0 %v106
    %278 = vmatmul.f32.gmra.mxu0 %v102
    %v279 = vpop.f32.mrf.mxu0
    %v280 = vadd.f32 %v234, %v279
    %281 = vmatmul.f32.gmra.mxu0 %v104
    %v282 = vpop.f32.mrf.mxu0
    %v283 = vadd.f32 %v237, %v282
    %284 = vdwg.mxu0
    %285 = vmatpush.msra.mxu0 %v137
    %286 = vmatpush.msra.mxu0 %v135
    %287 = vmatpush.msra.mxu0 %v133
    %288 = vmatpush.msra.mxu0 %v131
    %289 = vmatpush.msra.mxu0 %v129
    %290 = vmatpush.msra.mxu0 %v127
    %291 = vmatpush.msra.mxu0 %v125
    %292 = vmatpush.msra.mxu0 %v123
    %293 = vmatpush.msra.mxu0 %v121
    %294 = vmatpush.msra.mxu0 %v119
    %295 = vmatpush.msra.mxu0 %v117
    %296 = vmatpush.msra.mxu0 %v115
    %297 = vmatpush.msra.mxu0 %v113
    %298 = vmatpush.msra.mxu0 %v111
    %299 = vmatpush.msra.mxu0 %v109
    %300 = vmatpush.msra.mxu0 %v107
    %301 = vmatmul.f32.gmra.mxu0 %v102
    %v302 = vpop.f32.mrf.mxu0
    %v303 = vadd.f32 %v257, %v302
    %304 = vmatmul.f32.gmra.mxu0 %v104
    %v305 = vpop.f32.mrf.mxu0
    %v306 = vadd.f32 %v260, %v305
    %307 = vdwg.mxu0
    %s308 = scalar_lea.vmem [#allocation5], 256
    %v309 = vld [vmem:[%s308] sm:$0xff]
    %v310 = vld [vmem:[%s308 + $0x8] sm:$0xff]
    %v311 = vld [vmem:[%s308 + $0x10] sm:$0xff]
    %v312 = vld [vmem:[%s308 + $0x18] sm:$0xff]
    %v313 = vld [vmem:[%s308 + $0x20] sm:$0xff]
    %v314 = vld [vmem:[%s308 + $0x28] sm:$0xff]
    %v315 = vld [vmem:[%s308 + $0x30] sm:$0xff]
    %v316 = vld [vmem:[%s308 + $0x38] sm:$0xff]
    %v317 = vld [vmem:[%s308 + $0x40] sm:$0xff]
    %v318 = vld [vmem:[%s308 + $0x48] sm:$0xff]
    %v319 = vld [vmem:[%s308 + $0x50] sm:$0xff]
    %v320 = vld [vmem:[%s308 + $0x58] sm:$0xff]
    %v321 = vld [vmem:[%s308 + $0x60] sm:$0xff]
    %v322 = vld [vmem:[%s308 + $0x68] sm:$0xff]
    %v323 = vld [vmem:[%s308 + $0x70] sm:$0xff]
    %v324 = vld [vmem:[%s308 + $0x78] sm:$0xff]
    %v325 = vld [vmem:[%s308 + $0x80] sm:$0xff]
    %v326 = vld [vmem:[%s308 + $0x88] sm:$0xff]
    %v327 = vld [vmem:[%s308 + $0x90] sm:$0xff]
    %v328 = vld [vmem:[%s308 + $0x98] sm:$0xff]
    %v329 = vld [vmem:[%s308 + $0xa0] sm:$0xff]
    %v330 = vld [vmem:[%s308 + $0xa8] sm:$0xff]
    %v331 = vld [vmem:[%s308 + $0xb0] sm:$0xff]
    %v332 = vld [vmem:[%s308 + $0xb8] sm:$0xff]
    %v333 = vld [vmem:[%s308 + $0xc0] sm:$0xff]
    %v334 = vld [vmem:[%s308 + $0xc8] sm:$0xff]
    %v335 = vld [vmem:[%s308 + $0xd0] sm:$0xff]
    %v336 = vld [vmem:[%s308 + $0xd8] sm:$0xff]
    %v337 = vld [vmem:[%s308 + $0xe0] sm:$0xff]
    %v338 = vld [vmem:[%s308 + $0xe8] sm:$0xff]
    %v339 = vld [vmem:[%s308 + $0xf0] sm:$0xff]
    %v340 = vld [vmem:[%s308 + $0xf8] sm:$0xff]
    %341 = vmatpush.msra.mxu0 %v339
    %342 = vmatpush.msra.mxu0 %v337
    %343 = vmatpush.msra.mxu0 %v335
    %344 = vmatpush.msra.mxu0 %v333
    %345 = vmatpush.msra.mxu0 %v331
    %346 = vmatpush.msra.mxu0 %v329
    %347 = vmatpush.msra.mxu0 %v327
    %348 = vmatpush.msra.mxu0 %v325
    %349 = vmatpush.msra.mxu0 %v323
    %350 = vmatpush.msra.mxu0 %v321
    %351 = vmatpush.msra.mxu0 %v319
    %352 = vmatpush.msra.mxu0 %v317
    %353 = vmatpush.msra.mxu0 %v315
    %354 = vmatpush.msra.mxu0 %v313
    %355 = vmatpush.msra.mxu0 %v311
    %356 = vmatpush.msra.mxu0 %v309
    %357 = vmatmul.f32.gmra.mxu0 %v177
    %v358 = vpop.f32.mrf.mxu0
    %v359 = vadd.f32 0.0, %v358
    %360 = vmatmul.f32.gmra.mxu0 %v180
    %v361 = vpop.f32.mrf.mxu0
    %v362 = vadd.f32 0.0, %v361
    %363 = vdwg.mxu0
    %364 = vmatpush.msra.mxu0 %v340
    %365 = vmatpush.msra.mxu0 %v338
    %366 = vmatpush.msra.mxu0 %v336
    %367 = vmatpush.msra.mxu0 %v334
    %368 = vmatpush.msra.mxu0 %v332
    %369 = vmatpush.msra.mxu0 %v330
    %370 = vmatpush.msra.mxu0 %v328
    %371 = vmatpush.msra.mxu0 %v326
    %372 = vmatpush.msra.mxu0 %v324
    %373 = vmatpush.msra.mxu0 %v322
    %374 = vmatpush.msra.mxu0 %v320
    %375 = vmatpush.msra.mxu0 %v318
    %376 = vmatpush.msra.mxu0 %v316
    %377 = vmatpush.msra.mxu0 %v314
    %378 = vmatpush.msra.mxu0 %v312
    %379 = vmatpush.msra.mxu0 %v310
    %380 = vmatmul.f32.gmra.mxu0 %v177
    %v381 = vpop.f32.mrf.mxu0
    %v382 = vadd.f32 0.0, %v381
    %383 = vmatmul.f32.gmra.mxu0 %v180
    %v384 = vpop.f32.mrf.mxu0
    %v385 = vadd.f32 0.0, %v384
    %386 = vdwg.mxu0
    %387 = vmatpush.msra.mxu0 %v168
    %388 = vmatpush.msra.mxu0 %v166
    %389 = vmatpush.msra.mxu0 %v164
    %390 = vmatpush.msra.mxu0 %v162
    %391 = vmatpush.msra.mxu0 %v160
    %392 = vmatpush.msra.mxu0 %v158
    %393 = vmatpush.msra.mxu0 %v156
    %394 = vmatpush.msra.mxu0 %v154
    %395 = vmatpush.msra.mxu0 %v152
    %396 = vmatpush.msra.mxu0 %v150
    %397 = vmatpush.msra.mxu0 %v148
    %398 = vmatpush.msra.mxu0 %v146
    %399 = vmatpush.msra.mxu0 %v144
    %400 = vmatpush.msra.mxu0 %v142
    %401 = vmatpush.msra.mxu0 %v140
    %402 = vmatpush.msra.mxu0 %v138
    %403 = vmatmul.f32.gmra.mxu0 %v102
    %v404 = vpop.f32.mrf.mxu0
    %v405 = vadd.f32 %v359, %v404
    %406 = vmatmul.f32.gmra.mxu0 %v104
    %v407 = vpop.f32.mrf.mxu0
    %v408 = vadd.f32 %v362, %v407
    %409 = vdwg.mxu0
    %410 = vmatpush.msra.mxu0 %v169
    %411 = vmatpush.msra.mxu0 %v167
    %412 = vmatpush.msra.mxu0 %v165
    %413 = vmatpush.msra.mxu0 %v163
    %414 = vmatpush.msra.mxu0 %v161
    %415 = vmatpush.msra.mxu0 %v159
    %416 = vmatpush.msra.mxu0 %v157
    %417 = vmatpush.msra.mxu0 %v155
    %418 = vmatpush.msra.mxu0 %v153
    %419 = vmatpush.msra.mxu0 %v151
    %420 = vmatpush.msra.mxu0 %v149
    %421 = vmatpush.msra.mxu0 %v147
    %422 = vmatpush.msra.mxu0 %v145
    %423 = vmatpush.msra.mxu0 %v143
    %424 = vmatpush.msra.mxu0 %v141
    %425 = vmatpush.msra.mxu0 %v139
    %426 = vmatmul.f32.gmra.mxu0 %v102
    %v427 = vpop.f32.mrf.mxu0
    %v428 = vadd.f32 %v382, %v427
    %429 = vmatmul.f32.gmra.mxu0 %v104
    %v430 = vpop.f32.mrf.mxu0
    %v431 = vadd.f32 %v385, %v430
    %432 = vdwg.mxu0
    %vm433 = vcmask 1045504
    %v434 = vrot.slane %v102, 2
    %v435 = vrot.slane %v103, 2
    %v436 = vsel %vm433, %v434, %v435
    %v437 = vrot.slane %v104, 2
    %v438 = vrot.slane %v105, 2
    %v439 = vsel %vm433, %v437, %v438
    %s442 = scalar_lea.vmem [#allocation2], 512
    %v443 = vld [vmem:[%s442] sm:$0xff]
    %v444 = vld [vmem:[%s442 + $0x8] sm:$0xff]
    %v445 = vld [vmem:[%s442 + $0x10] sm:$0xff]
    %v446 = vld [vmem:[%s442 + $0x18] sm:$0xff]
    %v447 = vld [vmem:[%s442 + $0x20] sm:$0xff]
    %v448 = vld [vmem:[%s442 + $0x28] sm:$0xff]
    %v449 = vld [vmem:[%s442 + $0x30] sm:$0xff]
    %v450 = vld [vmem:[%s442 + $0x38] sm:$0xff]
    %v451 = vld [vmem:[%s442 + $0x40] sm:$0xff]
    %v452 = vld [vmem:[%s442 + $0x48] sm:$0xff]
    %v453 = vld [vmem:[%s442 + $0x50] sm:$0xff]
    %v454 = vld [vmem:[%s442 + $0x58] sm:$0xff]
    %v455 = vld [vmem:[%s442 + $0x60] sm:$0xff]
    %v456 = vld [vmem:[%s442 + $0x68] sm:$0xff]
    %v457 = vld [vmem:[%s442 + $0x70] sm:$0xff]
    %v458 = vld [vmem:[%s442 + $0x78] sm:$0xff]
    %v459 = vld [vmem:[%s442 + $0x80] sm:$0xff]
    %v460 = vld [vmem:[%s442 + $0x88] sm:$0xff]
    %v461 = vld [vmem:[%s442 + $0x90] sm:$0xff]
    %v462 = vld [vmem:[%s442 + $0x98] sm:$0xff]
    %v463 = vld [vmem:[%s442 + $0xa0] sm:$0xff]
    %v464 = vld [vmem:[%s442 + $0xa8] sm:$0xff]
    %v465 = vld [vmem:[%s442 + $0xb0] sm:$0xff]
    %v466 = vld [vmem:[%s442 + $0xb8] sm:$0xff]
    %v467 = vld [vmem:[%s442 + $0xc0] sm:$0xff]
    %v468 = vld [vmem:[%s442 + $0xc8] sm:$0xff]
    %v469 = vld [vmem:[%s442 + $0xd0] sm:$0xff]
    %v470 = vld [vmem:[%s442 + $0xd8] sm:$0xff]
    %v471 = vld [vmem:[%s442 + $0xe0] sm:$0xff]
    %v472 = vld [vmem:[%s442 + $0xe8] sm:$0xff]
    %v473 = vld [vmem:[%s442 + $0xf0] sm:$0xff]
    %v474 = vld [vmem:[%s442 + $0xf8] sm:$0xff]
    %475 = vmatpush.msra.mxu0 %v473
    %476 = vmatpush.msra.mxu0 %v471
    %477 = vmatpush.msra.mxu0 %v469
    %478 = vmatpush.msra.mxu0 %v467
    %479 = vmatpush.msra.mxu0 %v465
    %480 = vmatpush.msra.mxu0 %v463
    %481 = vmatpush.msra.mxu0 %v461
    %482 = vmatpush.msra.mxu0 %v459
    %483 = vmatpush.msra.mxu0 %v457
    %484 = vmatpush.msra.mxu0 %v455
    %485 = vmatpush.msra.mxu0 %v453
    %486 = vmatpush.msra.mxu0 %v451
    %487 = vmatpush.msra.mxu0 %v449
    %488 = vmatpush.msra.mxu0 %v447
    %489 = vmatpush.msra.mxu0 %v445
    %490 = vmatpush.msra.mxu0 %v443
    %491 = vmatmul.f32.gmra.mxu0 %v436
    %v492 = vpop.f32.mrf.mxu0
    %v493 = vadd.f32 0.0, %v492
    %494 = vmatmul.f32.gmra.mxu0 %v439
    %v495 = vpop.f32.mrf.mxu0
    %v496 = vadd.f32 0.0, %v495
    %497 = vdwg.mxu0
    %498 = vmatpush.msra.mxu0 %v474
    %499 = vmatpush.msra.mxu0 %v472
    %500 = vmatpush.msra.mxu0 %v470
    %501 = vmatpush.msra.mxu0 %v468
    %502 = vmatpush.msra.mxu0 %v466
    %503 = vmatpush.msra.mxu0 %v464
    %504 = vmatpush.msra.mxu0 %v462
    %505 = vmatpush.msra.mxu0 %v460
    %506 = vmatpush.msra.mxu0 %v458
    %507 = vmatpush.msra.mxu0 %v456
    %508 = vmatpush.msra.mxu0 %v454
    %509 = vmatpush.msra.mxu0 %v452
    %510 = vmatpush.msra.mxu0 %v450
    %511 = vmatpush.msra.mxu0 %v448
    %512 = vmatpush.msra.mxu0 %v446
    %513 = vmatpush.msra.mxu0 %v444
    %514 = vmatmul.f32.gmra.mxu0 %v436
    %v515 = vpop.f32.mrf.mxu0
    %v516 = vadd.f32 0.0, %v515
    %517 = vmatmul.f32.gmra.mxu0 %v439
    %v518 = vpop.f32.mrf.mxu0
    %v519 = vadd.f32 0.0, %v518
    %520 = vdwg.mxu0
    %v521 = vadd.f32 %v280, %v493
    %v522 = vadd.f32 %v303, %v516
    %v523 = vadd.f32 %v283, %v496
    %v524 = vadd.f32 %v306, %v519
    %s525 = scalar_lea.vmem [#allocation5], 512
    %v526 = vld [vmem:[%s525] sm:$0xff]
    %v527 = vld [vmem:[%s525 + $0x8] sm:$0xff]
    %v528 = vld [vmem:[%s525 + $0x10] sm:$0xff]
    %v529 = vld [vmem:[%s525 + $0x18] sm:$0xff]
    %v530 = vld [vmem:[%s525 + $0x20] sm:$0xff]
    %v531 = vld [vmem:[%s525 + $0x28] sm:$0xff]
    %v532 = vld [vmem:[%s525 + $0x30] sm:$0xff]
    %v533 = vld [vmem:[%s525 + $0x38] sm:$0xff]
    %v534 = vld [vmem:[%s525 + $0x40] sm:$0xff]
    %v535 = vld [vmem:[%s525 + $0x48] sm:$0xff]
    %v536 = vld [vmem:[%s525 + $0x50] sm:$0xff]
    %v537 = vld [vmem:[%s525 + $0x58] sm:$0xff]
    %v538 = vld [vmem:[%s525 + $0x60] sm:$0xff]
    %v539 = vld [vmem:[%s525 + $0x68] sm:$0xff]
    %v540 = vld [vmem:[%s525 + $0x70] sm:$0xff]
    %v541 = vld [vmem:[%s525 + $0x78] sm:$0xff]
    %v542 = vld [vmem:[%s525 + $0x80] sm:$0xff]
    %v543 = vld [vmem:[%s525 + $0x88] sm:$0xff]
    %v544 = vld [vmem:[%s525 + $0x90] sm:$0xff]
    %v545 = vld [vmem:[%s525 + $0x98] sm:$0xff]
    %v546 = vld [vmem:[%s525 + $0xa0] sm:$0xff]
    %v547 = vld [vmem:[%s525 + $0xa8] sm:$0xff]
    %v548 = vld [vmem:[%s525 + $0xb0] sm:$0xff]
    %v549 = vld [vmem:[%s525 + $0xb8] sm:$0xff]
    %v550 = vld [vmem:[%s525 + $0xc0] sm:$0xff]
    %v551 = vld [vmem:[%s525 + $0xc8] sm:$0xff]
    %v552 = vld [vmem:[%s525 + $0xd0] sm:$0xff]
    %v553 = vld [vmem:[%s525 + $0xd8] sm:$0xff]
    %v554 = vld [vmem:[%s525 + $0xe0] sm:$0xff]
    %v555 = vld [vmem:[%s525 + $0xe8] sm:$0xff]
    %v556 = vld [vmem:[%s525 + $0xf0] sm:$0xff]
    %v557 = vld [vmem:[%s525 + $0xf8] sm:$0xff]
    %558 = vmatpush.msra.mxu0 %v556
    %559 = vmatpush.msra.mxu0 %v554
    %560 = vmatpush.msra.mxu0 %v552
    %561 = vmatpush.msra.mxu0 %v550
    %562 = vmatpush.msra.mxu0 %v548
    %563 = vmatpush.msra.mxu0 %v546
    %564 = vmatpush.msra.mxu0 %v544
    %565 = vmatpush.msra.mxu0 %v542
    %566 = vmatpush.msra.mxu0 %v540
    %567 = vmatpush.msra.mxu0 %v538
    %568 = vmatpush.msra.mxu0 %v536
    %569 = vmatpush.msra.mxu0 %v534
    %570 = vmatpush.msra.mxu0 %v532
    %571 = vmatpush.msra.mxu0 %v530
    %572 = vmatpush.msra.mxu0 %v528
    %573 = vmatpush.msra.mxu0 %v526
    %574 = vmatmul.f32.gmra.mxu0 %v436
    %v575 = vpop.f32.mrf.mxu0
    %v576 = vadd.f32 0.0, %v575
    %577 = vmatmul.f32.gmra.mxu0 %v439
    %v578 = vpop.f32.mrf.mxu0
    %v579 = vadd.f32 0.0, %v578
    %580 = vdwg.mxu0
    %581 = vmatpush.msra.mxu0 %v557
    %582 = vmatpush.msra.mxu0 %v555
    %583 = vmatpush.msra.mxu0 %v553
    %584 = vmatpush.msra.mxu0 %v551
    %585 = vmatpush.msra.mxu0 %v549
    %586 = vmatpush.msra.mxu0 %v547
    %587 = vmatpush.msra.mxu0 %v545
    %588 = vmatpush.msra.mxu0 %v543
    %589 = vmatpush.msra.mxu0 %v541
    %590 = vmatpush.msra.mxu0 %v539
    %591 = vmatpush.msra.mxu0 %v537
    %592 = vmatpush.msra.mxu0 %v535
    %593 = vmatpush.msra.mxu0 %v533
    %594 = vmatpush.msra.mxu0 %v531
    %595 = vmatpush.msra.mxu0 %v529
    %596 = vmatpush.msra.mxu0 %v527
    %597 = vmatmul.f32.gmra.mxu0 %v436
    %v598 = vpop.f32.mrf.mxu0
    %v599 = vadd.f32 0.0, %v598
    %600 = vmatmul.f32.gmra.mxu0 %v439
    %v601 = vpop.f32.mrf.mxu0
    %v602 = vadd.f32 0.0, %v601
    %603 = vdwg.mxu0
    %v604 = vadd.f32 %v405, %v576
    %v605 = vadd.f32 %v428, %v599
    %v606 = vadd.f32 %v408, %v579
    %v607 = vadd.f32 %v431, %v602
    %v608 = vld [vmem:[%s2] sm:$0x3]
    %v610 = vperm.slane %v608, 0
    %v611 = vperm.slane %v608, 1
    %v614 = vadd.f32 %v521, %v610
    %v615 = vadd.f32 %v522, %v611
    %v616 = vadd.f32 %v523, %v610
    %v617 = vadd.f32 %v524, %v611
    %v618 = vld [vmem:[%s4] sm:$0x3]
    %v620 = vperm.slane %v618, 0
    %v621 = vperm.slane %v618, 1
    %v624 = vadd.f32 %v604, %v620
    %v625 = vadd.f32 %v605, %v621
    %v626 = vadd.f32 %v606, %v620
    %v627 = vadd.f32 %v607, %v621
    %v628 = vxor.u32 %v624, 2147483648
    %v629 = vxor.u32 %v625, 2147483648
    %v630 = vxor.u32 %v626, 2147483648
    %v631 = vxor.u32 %v627, 2147483648
    %v632 = vmul.f32 %v628, 1.442695
    %v633 = vpow.pop %v632
    %v634 = vmul.f32 %v629, 1.442695
    %v635 = vpow.pop %v634
    %v636 = vmul.f32 %v630, 1.442695
    %v637 = vpow.pop %v636
    %v638 = vmul.f32 %v631, 1.442695
    %v639 = vpow.pop %v638
    %v640 = vadd.f32 %v633, 1.0
    %v641 = vadd.f32 %v635, 1.0
    %v642 = vadd.f32 %v637, 1.0
    %v643 = vadd.f32 %v639, 1.0
    %v644 = vrcp.pop %v640
    %v645 = vmul.f32 %v640, %v644
    %v646 = vsub.f32 1.0, %v645
    %v647 = vmul.f32 %v644, %v646
    %v648 = vadd.f32 %v644, %v647
    %vm649 = vweird.f32 %v640
    %vm650 = vweird.f32 %v644
    %vm651 = vmor %vm649, %vm650
    %v652 = vsel %vm651, %v644, %v648
    %v653 = vand.u32 2147483647, %v640
    %vm654 = vcmp.eq.f32.partialorder %v653, 8.507059e+37
    %v655 = vand.u32 %v640, 2147483648
    %v656 = vor.u32 1.1754944e-38, %v655
    %v657 = vsel %vm654, %v656, %v652
    %v658 = vmul.f32 1.0, %v657
    %v659 = vrcp.pop %v641
    %v660 = vmul.f32 %v641, %v659
    %v661 = vsub.f32 1.0, %v660
    %v662 = vmul.f32 %v659, %v661
    %v663 = vadd.f32 %v659, %v662
    %vm664 = vweird.f32 %v641
    %vm665 = vweird.f32 %v659
    %vm666 = vmor %vm664, %vm665
    %v667 = vsel %vm666, %v659, %v663
    %v668 = vand.u32 2147483647, %v641
    %vm669 = vcmp.eq.f32.partialorder %v668, 8.507059e+37
    %v670 = vand.u32 %v641, 2147483648
    %v671 = vor.u32 1.1754944e-38, %v670
    %v672 = vsel %vm669, %v671, %v667
    %v673 = vmul.f32 1.0, %v672
    %v674 = vrcp.pop %v642
    %v675 = vmul.f32 %v642, %v674
    %v676 = vsub.f32 1.0, %v675
    %v677 = vmul.f32 %v674, %v676
    %v678 = vadd.f32 %v674, %v677
    %vm679 = vweird.f32 %v642
    %vm680 = vweird.f32 %v674
    %vm681 = vmor %vm679, %vm680
    %v682 = vsel %vm681, %v674, %v678
    %v683 = vand.u32 2147483647, %v642
    %vm684 = vcmp.eq.f32.partialorder %v683, 8.507059e+37
    %v685 = vand.u32 %v642, 2147483648
    %v686 = vor.u32 1.1754944e-38, %v685
    %v687 = vsel %vm684, %v686, %v682
    %v688 = vmul.f32 1.0, %v687
    %v689 = vrcp.pop %v643
    %v690 = vmul.f32 %v643, %v689
    %v691 = vsub.f32 1.0, %v690
    %v692 = vmul.f32 %v689, %v691
    %v693 = vadd.f32 %v689, %v692
    %vm694 = vweird.f32 %v643
    %vm695 = vweird.f32 %v689
    %vm696 = vmor %vm694, %vm695
    %v697 = vsel %vm696, %v689, %v693
    %v698 = vand.u32 2147483647, %v643
    %vm699 = vcmp.eq.f32.partialorder %v698, 8.507059e+37
    %v700 = vand.u32 %v643, 2147483648
    %v701 = vor.u32 1.1754944e-38, %v700
    %v702 = vsel %vm699, %v701, %v697
    %v703 = vmul.f32 1.0, %v702
    %v704 = vmul.f32 %v614, %v658
    %v705 = vmul.f32 %v615, %v673
    %v706 = vmul.f32 %v616, %v688
    %v707 = vmul.f32 %v617, %v703
    %v708 = vadd.f32 %v704, %v705
    %709 = vadd.xlane.f32.xlu0 %v708
    %v710 = vpop.xlane.xlu0 %709
    %v711 = vadd.f32 %v706, %v707
    %712 = vadd.xlane.f32.xlu0 %v711
    %v713 = vpop.xlane.xlu0 %712
    %v714 = vmul.f32 %v704, %v704
    %v715 = vmul.f32 %v705, %v705
    %v716 = vmul.f32 %v706, %v706
    %v717 = vmul.f32 %v707, %v707
    %v718 = vadd.f32 %v714, %v715
    %719 = vadd.xlane.f32.xlu0 %v718
    %v720 = vpop.xlane.xlu0 %719
    %v721 = vadd.f32 %v716, %v717
    %722 = vadd.xlane.f32.xlu0 %v721
    %v723 = vpop.xlane.xlu0 %722
    %v724 = vmul.f32 %v710, 0.00390625
    %v725 = vmul.f32 %v713, 0.00390625
    %v726 = vmul.f32 %v720, 0.00390625
    %v727 = vmul.f32 %v723, 0.00390625
    %v728 = vmul.f32 %v724, %v724
    %v729 = vmul.f32 %v725, %v725
    %v730 = vsub.f32 %v726, %v728
    %v731 = vsub.f32 %v727, %v729
    %v732 = vmax.f32 %v730, 0.0
    %v733 = vmax.f32 %v731, 0.0
    %v734 = vsub.f32 %v704, %v724
    %v735 = vsub.f32 %v705, %v724
    %v736 = vsub.f32 %v706, %v725
    %v737 = vsub.f32 %v707, %v725
    %v738 = vadd.f32 %v732, 1e-05
    %v739 = vadd.f32 %v733, 1e-05
    %v740 = vrsqrt.pop %v738
    %v741 = vmul.f32 %v740, %v738
    %v742 = vmul.f32 %v741, %v740
    %v743 = vmul.f32 0.5, %v742
    %v744 = vsub.f32 1.5, %v743
    %v745 = vmul.f32 %v740, %v744
    %vm746 = vweird.f32 %v738
    %vm747 = vweird.f32 %v740
    %vm748 = vmor %vm746, %vm747
    %v749 = vsel %vm748, %v740, %v745
    %v750 = vrsqrt.pop %v739
    %v751 = vmul.f32 %v750, %v739
    %v752 = vmul.f32 %v751, %v750
    %v753 = vmul.f32 0.5, %v752
    %v754 = vsub.f32 1.5, %v753
    %v755 = vmul.f32 %v750, %v754
    %vm756 = vweird.f32 %v739
    %vm757 = vweird.f32 %v750
    %vm758 = vmor %vm756, %vm757
    %v759 = vsel %vm758, %v750, %v755
    %v760 = vmul.f32 %v734, %v749
    %v761 = vmul.f32 %v735, %v749
    %v762 = vmul.f32 %v736, %v759
    %v763 = vmul.f32 %v737, %v759
    %v764 = vld [vmem:[%s5] sm:$0x3]
    %v766 = vperm.slane %v764, 0
    %v767 = vperm.slane %v764, 1
    %v770 = vmul.f32 %v760, %v766
    %v771 = vmul.f32 %v761, %v767
    %v772 = vmul.f32 %v762, %v766
    %v773 = vmul.f32 %v763, %v767
    %v774 = vld [vmem:[%s6] sm:$0x3]
    %v776 = vperm.slane %v774, 0
    %v777 = vperm.slane %v774, 1
    %v780 = vadd.f32 %v770, %v776
    %v781 = vadd.f32 %v771, %v777
    %v782 = vadd.f32 %v772, %v776
    %v783 = vadd.f32 %v773, %v777
    %v784 = vld [vmem:[#allocation7] sm:$0xff]
    %v785 = vld [vmem:[#allocation7 + $0x8] sm:$0xff]
    %v786 = vld [vmem:[#allocation7 + $0x10] sm:$0xff]
    %v787 = vld [vmem:[#allocation7 + $0x18] sm:$0xff]
    %v788 = vld [vmem:[#allocation7 + $0x20] sm:$0xff]
    %v789 = vld [vmem:[#allocation7 + $0x28] sm:$0xff]
    %v790 = vld [vmem:[#allocation7 + $0x30] sm:$0xff]
    %v791 = vld [vmem:[#allocation7 + $0x38] sm:$0xff]
    %v792 = vld [vmem:[#allocation7 + $0x40] sm:$0xff]
    %v793 = vld [vmem:[#allocation7 + $0x48] sm:$0xff]
    %v794 = vld [vmem:[#allocation7 + $0x50] sm:$0xff]
    %v795 = vld [vmem:[#allocation7 + $0x58] sm:$0xff]
    %v796 = vld [vmem:[#allocation7 + $0x60] sm:$0xff]
    %v797 = vld [vmem:[#allocation7 + $0x68] sm:$0xff]
    %v798 = vld [vmem:[#allocation7 + $0x70] sm:$0xff]
    %v799 = vld [vmem:[#allocation7 + $0x78] sm:$0xff]
    %v800 = vld [vmem:[#allocation7 + $0x80] sm:$0xff]
    %v801 = vld [vmem:[#allocation7 + $0x88] sm:$0xff]
    %v802 = vld [vmem:[#allocation7 + $0x90] sm:$0xff]
    %v803 = vld [vmem:[#allocation7 + $0x98] sm:$0xff]
    %v804 = vld [vmem:[#allocation7 + $0xa0] sm:$0xff]
    %v805 = vld [vmem:[#allocation7 + $0xa8] sm:$0xff]
    %v806 = vld [vmem:[#allocation7 + $0xb0] sm:$0xff]
    %v807 = vld [vmem:[#allocation7 + $0xb8] sm:$0xff]
    %v808 = vld [vmem:[#allocation7 + $0xc0] sm:$0xff]
    %v809 = vld [vmem:[#allocation7 + $0xc8] sm:$0xff]
    %v810 = vld [vmem:[#allocation7 + $0xd0] sm:$0xff]
    %v811 = vld [vmem:[#allocation7 + $0xd8] sm:$0xff]
    %v812 = vld [vmem:[#allocation7 + $0xe0] sm:$0xff]
    %v813 = vld [vmem:[#allocation7 + $0xe8] sm:$0xff]
    %v814 = vld [vmem:[#allocation7 + $0xf0] sm:$0xff]
    %v815 = vld [vmem:[#allocation7 + $0xf8] sm:$0xff]
    %v816 = vld [vmem:[%s8] sm:$0x1]
    %v818 = vperm.slane %v816, 0
    %820 = vmatpush.msra.mxu0 %v799
    %821 = vmatpush.msra.mxu0 %v798
    %822 = vmatpush.msra.mxu0 %v797
    %823 = vmatpush.msra.mxu0 %v796
    %824 = vmatpush.msra.mxu0 %v795
    %825 = vmatpush.msra.mxu0 %v794
    %826 = vmatpush.msra.mxu0 %v793
    %827 = vmatpush.msra.mxu0 %v792
    %828 = vmatpush.msra.mxu0 %v791
    %829 = vmatpush.msra.mxu0 %v790
    %830 = vmatpush.msra.mxu0 %v789
    %831 = vmatpush.msra.mxu0 %v788
    %832 = vmatpush.msra.mxu0 %v787
    %833 = vmatpush.msra.mxu0 %v786
    %834 = vmatpush.msra.mxu0 %v785
    %835 = vmatpush.msra.mxu0 %v784
    %836 = vmatmul.f32.gmra.mxu0 %v780
    %v837 = vpop.f32.mrf.mxu0
    %v838 = vadd.f32 %v818, %v837
    %839 = vmatmul.f32.gmra.mxu0 %v782
    %v840 = vpop.f32.mrf.mxu0
    %v841 = vadd.f32 %v818, %v840
    %842 = vdwg.mxu0
    %843 = vmatpush.msra.mxu0 %v815
    %844 = vmatpush.msra.mxu0 %v814
    %845 = vmatpush.msra.mxu0 %v813
    %846 = vmatpush.msra.mxu0 %v812
    %847 = vmatpush.msra.mxu0 %v811
    %848 = vmatpush.msra.mxu0 %v810
    %849 = vmatpush.msra.mxu0 %v809
    %850 = vmatpush.msra.mxu0 %v808
    %851 = vmatpush.msra.mxu0 %v807
    %852 = vmatpush.msra.mxu0 %v806
    %853 = vmatpush.msra.mxu0 %v805
    %854 = vmatpush.msra.mxu0 %v804
    %855 = vmatpush.msra.mxu0 %v803
    %856 = vmatpush.msra.mxu0 %v802
    %857 = vmatpush.msra.mxu0 %v801
    %858 = vmatpush.msra.mxu0 %v800
    %859 = vmatmul.f32.gmra.mxu0 %v781
    %v860 = vpop.f32.mrf.mxu0
    %v861 = vadd.f32 %v838, %v860
    %862 = vmatmul.f32.gmra.mxu0 %v783
    %v863 = vpop.f32.mrf.mxu0
    %v864 = vadd.f32 %v841, %v863
    %865 = vdwg.mxu0
    %v866 = vmax.f32 %v861, 0.0
    %v867 = vmax.f32 %v864, 0.0
    %v868 = vld [vmem:[#allocation8] sm:$0xff]
    %v869 = vld [vmem:[#allocation8 + $0x8] sm:$0xff]
    %v870 = vld [vmem:[#allocation8 + $0x10] sm:$0xff]
    %v871 = vld [vmem:[#allocation8 + $0x18] sm:$0xff]
    %v872 = vld [vmem:[#allocation8 + $0x20] sm:$0xff]
    %v873 = vld [vmem:[#allocation8 + $0x28] sm:$0xff]
    %v874 = vld [vmem:[#allocation8 + $0x30] sm:$0xff]
    %v875 = vld [vmem:[#allocation8 + $0x38] sm:$0xff]
    %v876 = vld [vmem:[#allocation8 + $0x40] sm:$0xff]
    %v877 = vld [vmem:[#allocation8 + $0x48] sm:$0xff]
    %v878 = vld [vmem:[#allocation8 + $0x50] sm:$0xff]
    %v879 = vld [vmem:[#allocation8 + $0x58] sm:$0xff]
    %v880 = vld [vmem:[#allocation8 + $0x60] sm:$0xff]
    %v881 = vld [vmem:[#allocation8 + $0x68] sm:$0xff]
    %v882 = vld [vmem:[#allocation8 + $0x70] sm:$0xff]
    %v883 = vld [vmem:[#allocation8 + $0x78] sm:$0xff]
    %v884 = vld [vmem:[%s10] sm:$0x1]
    %v886 = vperm.slane %v884, 0
    %888 = vmatpush.msra.mxu0 %v883
    %889 = vmatpush.msra.mxu0 %v882
    %890 = vmatpush.msra.mxu0 %v881
    %891 = vmatpush.msra.mxu0 %v880
    %892 = vmatpush.msra.mxu0 %v879
    %893 = vmatpush.msra.mxu0 %v878
    %894 = vmatpush.msra.mxu0 %v877
    %895 = vmatpush.msra.mxu0 %v876
    %896 = vmatpush.msra.mxu0 %v875
    %897 = vmatpush.msra.mxu0 %v874
    %898 = vmatpush.msra.mxu0 %v873
    %899 = vmatpush.msra.mxu0 %v872
    %900 = vmatpush.msra.mxu0 %v871
    %901 = vmatpush.msra.mxu0 %v870
    %902 = vmatpush.msra.mxu0 %v869
    %903 = vmatpush.msra.mxu0 %v868
    %904 = vmatmul.f32.gmra.mxu0 %v866
    %v905 = vpop.f32.mrf.mxu0
    %v906 = vadd.f32 %v886, %v905
    %907 = vmatmul.f32.gmra.mxu0 %v867
    %v908 = vpop.f32.mrf.mxu0
    %v909 = vadd.f32 %v886, %v908
    %910 = vdwg.mxu0
    %911 = vst [vmem:[#allocation10] sm:$0xff] %v906
    %912 = vst [vmem:[#allocation10 + $0x8] sm:$0xff] %v909
    // Predicated region
    $region62: #{tpu_custom_call.1} parent=1 // pred_check
      _
    $region63: #{tpu_custom_call.1} parent=1 // pred_check_branch
      %914 = sbr.rel (0) target = $region65
    $region64: #{tpu_custom_call.1} parent=1 // pred_region
      %916 = vsyncadd [#allocation4], 0
      %s917 = sshll.u32 [#allocation10], 4
      %s918 = int_to_ptr.vmem [resolvable:$true] %s917
      %s919 = sshll.u32 %s11, 4
      %s920 = int_to_ptr.hbm [resolvable:$true] %s919
      %925 = dma.vmem_to_hbm [thread:$0]  %s918, 256, %s920, [#allocation4], 128, 128, 8
    $region65: #{tpu_custom_call.1} parent=1 // pred_fallthru
      _
    // Predicated region
    $region66: #{tpu_custom_call.1} parent=1 // pred_check
      _
    $region67: #{tpu_custom_call.1} parent=1 // pred_check_branch
      %927 = sbr.rel (0) target = $region69
    $region68: #{tpu_custom_call.1} parent=1 // pred_region
      %929 = dma.done [#allocation4], 256
    $region69: #{tpu_custom_call.1} parent=1 // pred_fallthru
      _
    %930 = vsyncpa [#allocation3], 1
    %931 = vsyncpa [#allocation6], 1
    %932 = vsyncpa [#allocation9], 1
    %933 = vsyncpa [#allocation4], 1

</llo_original>
